<compile_context>
chip_gen: v6e
topology: v6e:2x2x1
jax: 0.10.0
libtpu: 0.0.40
codegen_flags: <defaults>
</compile_context>

<pallas_src>
import jax
import jax.numpy as jnp
from jax.experimental import pallas as pl
from jax.experimental.pallas import tpu as pltpu

LANES = 128
SUBLANES = 8


def _make_kernel(tile_rows, tiles_per_split, n_blocks, total_rows, needs_mask):
    """Build the kernel with the static tiling parameters closed over."""

    def kernel(p_ref, d_ref, o_ref):
        i = pl.program_id(1)  # inner ("arbitrary") reduction axis

        @pl.when(i == 0)
        def _():
            o_ref[...] = jnp.zeros_like(o_ref)

        # Cast on-chip (free relative to the DMA) -> f32 accumulation.
        p = p_ref[...].astype(jnp.float32)
        d = d_ref[...].astype(jnp.float32)
        prod = jax.nn.sigmoid(p) * d  # EUP exp + VPU mul, hidden under the DMA

        if needs_mask:
            # Zero out rows that lie past the true row count (stale data in the
            # partial last block and in clamped duplicate blocks).
            c = pl.program_id(0)
            logical_blk = c * tiles_per_split + i
            row0 = logical_blk * tile_rows
            rows = jax.lax.broadcasted_iota(jnp.int32, (tile_rows, LANES), 0)
            prod = jnp.where(row0 + rows < total_rows, prod, 0.0)

        if tile_rows % SUBLANES == 0:
            # Pure vreg adds: (tile_rows, 128) -> (8, 128) partials, no XLU.
            psum = prod.reshape(tile_rows // SUBLANES, SUBLANES, LANES).sum(axis=0)
            o_ref[0] += psum
        else:
            # Rare fallback (only when the whole slab fits in one block that is
            # not sublane aligned): accumulate a (1, 128) lane-vector.
            o_ref[0, 0:1, :] += prod.sum(axis=0, keepdims=True)

    return kernel


def surface_loss(predicted_output, distance_maps, tile_rows=4096, num_splits=2):
    assert predicted_output.shape == distance_maps.shape
    n = int(predicted_output.size)

    p_flat = jnp.ravel(predicted_output)
    d_flat = jnp.ravel(distance_maps)

    # Main lane-dense slab + tiny (<128 elem) tail handled in plain JAX.
    n_main = (n // LANES) * LANES
    tail = n - n_main
    if tail > 0:
        pt = p_flat[n_main:].astype(jnp.float32)
        dt = d_flat[n_main:].astype(jnp.float32)
        tail_sum = jnp.sum(jax.nn.sigmoid(pt) * dt)
    else:
        tail_sum = jnp.float32(0.0)

    if n_main == 0:
        # Input smaller than one lane row: nothing for the kernel to do.
        return tail_sum / jnp.float32(n)

    total_rows = n_main // LANES
    p2 = p_flat[:n_main].reshape(total_rows, LANES)  # original dtype, no pad/cast
    d2 = d_flat[:n_main].reshape(total_rows, LANES)

    # ---- tile sizing --------------------------------------------------------
    tile_rows = max(SUBLANES, min(int(tile_rows), 8192))  # cap for v7x VMEM budget
    if tile_rows >= total_rows:
        tile_rows = total_rows                  # single block == full dim (legal)
    else:
        tile_rows = (tile_rows // SUBLANES) * SUBLANES

    n_blocks = pl.cdiv(total_rows, tile_rows)
    splits = num_splits if n_blocks >= num_splits else 1   # v7x: 2 TCs; no-op elsewhere
    tiles_per_split = pl.cdiv(n_blocks, splits)
    needs_mask = (total_rows % tile_rows != 0) or (splits * tiles_per_split != n_blocks)

    def in_index_map(c, i):
        blk = c * tiles_per_split + i
        if needs_mask:
            # Clamp so no block start is fully out of bounds; the in-kernel mask
            # zeroes any duplicated / out-of-range rows.
            blk = jnp.minimum(blk, n_blocks - 1)
        return (blk, 0)

    kernel = _make_kernel(tile_rows, tiles_per_split, n_blocks, total_rows, needs_mask)

    # Explicit VMEM budget: 2 inputs x 2 pipeline buffers x tile (+ headroom),
    # capped at 64 MiB (v7x physical per-TC VMEM).
    bytes_per_elem = p2.dtype.itemsize + d2.dtype.itemsize
    pipeline_bytes = 2 * tile_rows * LANES * bytes_per_elem
    vmem_limit = int(min(64 * 2**20, max(32 * 2**20, pipeline_bytes + (8 * 2**20))))

    partials = pl.pallas_call(
        kernel,
        out_shape=jax.ShapeDtypeStruct((splits, SUBLANES, LANES), jnp.float32),
        grid_spec=pltpu.PrefetchScalarGridSpec(
            num_scalar_prefetch=0,
            grid=(splits, tiles_per_split),
            in_specs=[
                pl.BlockSpec((tile_rows, LANES), in_index_map),
                pl.BlockSpec((tile_rows, LANES), in_index_map),
            ],
            # Output block index is constant over the inner axis -> resident
            # f32 accumulator; one block per split for megacore.
            out_specs=pl.BlockSpec((1, SUBLANES, LANES), lambda c, i: (c, 0, 0)),
        ),
        compiler_params=pltpu.CompilerParams(
            dimension_semantics=("parallel", "arbitrary"),
            vmem_limit_bytes=vmem_limit,
        ),
    )(p2, d2)

    # Single cross-lane/cross-split reduction + mean over the TRUE element count.
    total = jnp.sum(partials) + tail_sum
    return total / jnp.float32(n)


def _surface_loss_ref(predicted_output, distance_maps):
    p = jax.nn.sigmoid(predicted_output.astype(jnp.float32))
    return jnp.mean(p * distance_maps.astype(jnp.float32))


if __name__ == "__main__":
    key = jax.random.PRNGKey(0)
    k1, k2 = jax.random.split(key)

    # Matches the module's usage: prediction logits + distance maps, same shape.
    shape = (2, 4, 16, 16)  # N, C, H, W
    predicted = jax.random.normal(k1, shape, dtype=jnp.float32)
    dist_maps = jax.random.normal(k2, shape, dtype=jnp.float32)

    loss_fn = jax.jit(surface_loss)
    loss = jax.block_until_ready(loss_fn(predicted, dist_maps))

    ref = _surface_loss_ref(predicted, dist_maps)
    assert jnp.allclose(loss, ref, atol=1e-5, rtol=1e-5), (loss, ref)

    print("KERNEL_OK")
</pallas_src>

<mosaic_0001>
module attributes {stable_mosaic.version = 11 : i64} {
  func.func @kernel(%arg0: i32, %arg1: i32, %arg2: memref<16x128xf32, #tpu.memory_space<vmem>>, %arg3: memref<16x128xf32, #tpu.memory_space<vmem>>, %arg4: memref<1x8x128xf32, #tpu.memory_space<vmem>>) attributes {dimension_semantics = [#tpu.dimension_semantics<parallel>, #tpu.dimension_semantics<arbitrary>], iteration_bounds = array<i64: 1, 1>, scalar_prefetch = 0 : i64, scratch_operands = 0 : i64, tpu.core_type = #tpu.core_type<tc>, window_params = [{transform_indices = @transform_0, window_bounds = array<i64: 16, 128>}, {transform_indices = @transform_1, window_bounds = array<i64: 16, 128>}, {transform_indices = @transform_2, window_bounds = array<i64: 1, 8, 128>}]} {
    %c0_i32 = arith.constant 0 : i32
    %0 = arith.cmpi eq, %arg1, %c0_i32 : i32
    %1 = arith.extui %0 : i1 to i32
    %c0_i32_0 = arith.constant 0 : i32
    %2 = arith.cmpi ne, %1, %c0_i32_0 : i32
    scf.if %2 {
      %cst_11 = arith.constant 0.000000e+00 : f32
      %19 = vector.broadcast %cst_11 : f32 to vector<1x8x128xf32>
      %c0_12 = arith.constant 0 : index
      %c0_13 = arith.constant 0 : index
      %c0_14 = arith.constant 0 : index
      %20 = vector.load %arg4[%c0_12, %c0_13, %c0_14] : memref<1x8x128xf32, #tpu.memory_space<vmem>>, vector<1x8x128xf32>
      tpu.vector_store %arg4[%c0_12, %c0_13, %c0_14], %19 {strides = array<i32>} : memref<1x8x128xf32, #tpu.memory_space<vmem>>, vector<1x8x128xf32>,
    } else {
    }
    %c0 = arith.constant 0 : index
    %c0_1 = arith.constant 0 : index
    %3 = vector.load %arg2[%c0, %c0_1] : memref<16x128xf32, #tpu.memory_space<vmem>>, vector<16x128xf32>
    %c0_2 = arith.constant 0 : index
    %c0_3 = arith.constant 0 : index
    %4 = vector.load %arg3[%c0_2, %c0_3] : memref<16x128xf32, #tpu.memory_space<vmem>>, vector<16x128xf32>
    %5 = arith.negf %3 : vector<16x128xf32>
    %6 = math.exp %5 : vector<16x128xf32>
    %cst = arith.constant 1.000000e+00 : f32
    %7 = vector.broadcast %cst : f32 to vector<16x128xf32>
    %8 = arith.addf %7, %6 : vector<16x128xf32>
    %9 = arith.divf %7, %8 : vector<16x128xf32>
    %10 = arith.mulf %9, %4 : vector<16x128xf32>
    %11 = vector.shape_cast %10 : vector<16x128xf32> to vector<2x8x128xf32>
    %cst_4 = arith.constant dense<0.000000e+00> : vector<8x128xf32>
    %12 = vector.multi_reduction <add>, %11, %cst_4 [0] : vector<2x8x128xf32> to vector<8x128xf32>
    %c0_5 = arith.constant 0 : index
    %c0_6 = arith.constant 0 : index
    %c0_7 = arith.constant 0 : index
    %13 = vector.load %arg4[%c0_5, %c0_6, %c0_7] : memref<1x8x128xf32, #tpu.memory_space<vmem>>, vector<1x8x128xf32>
    %14 = vector.shape_cast %13 : vector<1x8x128xf32> to vector<8x128xf32>
    %15 = arith.addf %14, %12 : vector<8x128xf32>
    %c0_8 = arith.constant 0 : index
    %c0_9 = arith.constant 0 : index
    %c0_10 = arith.constant 0 : index
    %16 = vector.load %arg4[%c0_8, %c0_9, %c0_10] : memref<1x8x128xf32, #tpu.memory_space<vmem>>, vector<1x8x128xf32>
    %17 = vector.shape_cast %16 : vector<1x8x128xf32> to vector<8x128xf32>
    %18 = vector.shape_cast %15 : vector<8x128xf32> to vector<1x8x128xf32>
    tpu.vector_store %arg4[%c0_8, %c0_9, %c0_10], %18 {strides = array<i32>} : memref<1x8x128xf32, #tpu.memory_space<vmem>>, vector<1x8x128xf32>,
    return
  }
  func.func @transform_0(%arg0: i32, %arg1: i32) -> (i32, i32) {
    %c1_i32 = arith.constant 1 : i32
    %0 = arith.muli %arg0, %c1_i32 : i32
    %1 = arith.addi %0, %arg1 : i32
    %c0_i32 = arith.constant 0 : i32
    %c0_i32_0 = arith.constant 0 : i32
    return %1, %c0_i32 : i32, i32
  }
  func.func @transform_1(%arg0: i32, %arg1: i32) -> (i32, i32) {
    %c1_i32 = arith.constant 1 : i32
    %0 = arith.muli %arg0, %c1_i32 : i32
    %1 = arith.addi %0, %arg1 : i32
    %c0_i32 = arith.constant 0 : i32
    %c0_i32_0 = arith.constant 0 : i32
    return %1, %c0_i32 : i32, i32
  }
  func.func @transform_2(%arg0: i32, %arg1: i32) -> (i32, i32, i32) {
    %c0_i32 = arith.constant 0 : i32
    %c0_i32_0 = arith.constant 0 : i32
    %c0_i32_1 = arith.constant 0 : i32
    return %arg0, %c0_i32, %c0_i32_0 : i32, i32, i32
  }
}

</mosaic_0001>

<llo_original>
// kernel: surface_loss.1
$region0: #{surface_loss.1}
  #allocation0 [shape = 'u32[]', space=smem, size = 0x4, offset = 0x4, fixed_abs, tag = 'smem constant byte address 0x4 - core index']
  #allocation1 [shape = 'u32[144,128]{1,0:T(1,128)}', space=vmem, size = 0x12000, scoped, tag = 'internal scratch']
  %s0 = inlined_call_operand.vmem [shape: f32[16,128], index: 0, kind: input, shape index: {}]
  %s1 = inlined_call_operand.vmem [shape: f32[16,128], index: 1, kind: input, shape index: {}]
  %s2 = inlined_call_operand.vmem [shape: f32[1,8,128], index: 2, kind: output, shape index: {}]
  %s3 = sld [smem:[#allocation0]]
  $region22: #{surface_loss.1} parent=0
    _
  %s5 = ssub.s32 1, %s3
  %s6 = scalar_select 0, %s5, %s3
  // Predicated region
  $region2: #{surface_loss.1} parent=0 // pred_check
    _
  $region3: #{surface_loss.1} parent=0 // pred_check_branch
    %8 = sbr.rel (0) target = $region5
  $region4: #{surface_loss.1} parent=0 // pred_region
    %s9 = sadd.s32 0, 0
    %s10 = smul.u32 2, %s9
    %p11 = scmp.lt.s32.totalorder %s10, 1
    %s12 = scalar_select %p11, %s10, 1
    %s13 = smul.addr %s12, 8
    %s14 = scalar_lea.vmem %s0, %s13
    %s15 = sadd.s32 0, 0
    %s16 = smul.u32 2, %s15
  $region5: #{surface_loss.1} parent=0 // pred_fallthru
    _
  // Predicated region
  $region6: #{surface_loss.1} parent=0 // pred_check
    _
  $region7: #{surface_loss.1} parent=0 // pred_check_branch
    %18 = sbr.rel (0) target = $region9
  $region8: #{surface_loss.1} parent=0 // pred_region
    %s19 = sadd.s32 0, 0
    %s20 = smul.u32 2, %s19
    %p21 = scmp.lt.s32.totalorder %s20, 1
    %s22 = scalar_select %p21, %s20, 1
    %s23 = smul.addr %s22, 8
    %s24 = scalar_lea.vmem %s1, %s23
    %s25 = sadd.s32 0, 0
    %s26 = smul.u32 2, %s25
  $region9: #{surface_loss.1} parent=0 // pred_fallthru
    _
  %s27 = sadd.s32 0, 0
  %s28 = smul.u32 2, %s27
  %p29 = scmp.lt.s32.totalorder %s28, 1
  %s30 = scalar_select %p29, %s28, 1
  %s31 = smul.addr %s30, 8
  %s32 = scalar_lea.vmem %s0, %s31
  %s33 = sadd.s32 0, 0
  %s34 = smul.u32 2, %s33
  %p35 = scmp.lt.s32.totalorder %s34, 1
  %s36 = scalar_select %p35, %s34, 1
  %s37 = smul.addr %s36, 8
  %s38 = scalar_lea.vmem %s1, %s37
  %s39 = sadd.s32 0, 0
  %s40 = smul.u32 2, %s39
  %p41 = scmp.lt.s32.totalorder %s40, 1
  %s42 = scalar_select %p41, %s40, 1
  %s43 = smul.addr %s42, 8
  %s44 = scalar_lea.vmem %s0, %s43
  %s45 = sadd.s32 0, 0
  %s46 = smul.u32 2, %s45
  %s47 = sadd.s32 0, 0
  %s48 = smul.u32 2, %s47
  %p49 = scmp.lt.s32.totalorder %s48, 1
  %s50 = scalar_select %p49, %s48, 1
  %s51 = smul.addr %s50, 8
  %s52 = scalar_lea.vmem %s1, %s51
  %s53 = sadd.s32 0, 0
  %s54 = smul.u32 2, %s53
  %p55 = scmp.eq.s32.totalorder 0, 0
  // Predicated region
  $region10: #{surface_loss.1} parent=0 // pred_check
    %p56 = pneg %p55
  $region11: #{surface_loss.1} parent=0 // pred_check_branch
    %58 = sbr.rel (%p56) target = $region13
  $region12: #{surface_loss.1} parent=0 // pred_region
    %59 = vst [vmem:[%s2] sm:$0xff] 0.0
  $region13: #{surface_loss.1} parent=0 // pred_fallthru
    _
  %v60 = vld [vmem:[%s44] sm:$0xff]
  %v61 = vld [vmem:[%s44 + $0x8] sm:$0xff]
  %v62 = vld [vmem:[%s52] sm:$0xff]
  %v63 = vld [vmem:[%s52 + $0x8] sm:$0xff]
  %v64 = vxor.u32 %v60, 2147483648
  %v65 = vxor.u32 %v61, 2147483648
  %v66 = vmul.f32 %v64, 1.442695
  %v67 = vpow.pop %v66
  %v68 = vmul.f32 %v65, 1.442695
  %v69 = vpow.pop %v68
  %v70 = vadd.f32 %v67, 1.0
  %v71 = vadd.f32 %v69, 1.0
  %v72 = vrcp.pop %v70
  %v73 = vmul.f32 1.0, %v72
  %v74 = vrcp.pop %v71
  %v75 = vmul.f32 1.0, %v74
  %v76 = vmul.f32 %v73, %v62
  %v77 = vmul.f32 %v75, %v63
  %v78 = vadd.f32 %v76, %v77
  %v79 = vld [vmem:[%s2] sm:$0xff]
  %v80 = vadd.f32 %v79, %v78
  %81 = vst [vmem:[%s2] sm:$0xff] %v80
  // Predicated region
  $region14: #{surface_loss.1} parent=0 // pred_check
    _
  $region15: #{surface_loss.1} parent=0 // pred_check_branch
    %83 = sbr.rel (0) target = $region17
  $region16: #{surface_loss.1} parent=0 // pred_region
    _
  $region17: #{surface_loss.1} parent=0 // pred_fallthru
    _
  // Predicated region
  $region18: #{surface_loss.1} parent=0 // pred_check
    _
  $region19: #{surface_loss.1} parent=0 // pred_check_branch
    %85 = sbr.rel (0) target = $region21
  $region20: #{surface_loss.1} parent=0 // pred_region
    _
  $region21: #{surface_loss.1} parent=0 // pred_fallthru
    _

</llo_original>
